<compile_context>
chip_gen: v5e
topology: v5e:2x2
jax: 0.10.0
libtpu: 0.0.40
codegen_flags: <defaults>
</compile_context>

<pallas_src>
import functools
import numpy as np
import jax
import jax.numpy as jnp
from jax.experimental import pallas as pl
from jax.experimental.pallas import tpu as pltpu

IN_CHANNELS = 3
OUT_CHANNELS = 16
KERNEL_SIZE = 3
NUM_GROUPS = 8
POOL = 2
CLAMP_MIN = 0.0
CLAMP_MAX = 1.0
EPS = 1e-5            # PyTorch GroupNorm default
CPAD = 128            # channel axis padded to a full lane width


def fused_kernel(patches_ref, w_ref, params_ref, o_ref, *,
                 count, rows_pad, b_tile, cout, ch_per_group):
    k1 = patches_ref.shape[-1]
    rows_b = POOL * POOL * rows_pad                       # rows per batch element (224)

    # ---- conv as ONE matmul over the whole batch block; bias folded via ones column ----
    pm = patches_ref[...].reshape(b_tile * rows_b, k1)
    x = jnp.dot(pm, w_ref[...], preferred_element_type=jnp.float32)   # (b_tile*224, CPAD)

    # ---- 0/1 group-reduce+broadcast matrix built in-kernel from iota (no HBM constant) -
    # gmat[i, j] = 1 iff channels i and j belong to the same GroupNorm group.
    ci = jax.lax.broadcasted_iota(jnp.int32, (CPAD, CPAD), 0).astype(jnp.float32)
    cj = jax.lax.broadcasted_iota(jnp.int32, (CPAD, CPAD), 1).astype(jnp.float32)
    inv_cpg = 1.0 / ch_per_group                          # exact for ch_per_group = 2
    gmat = (jnp.floor(ci * inv_cpg) == jnp.floor(cj * inv_cpg)).astype(jnp.float32)

    # one-hot (Cout, CPAD) matrix: folds the channels-major output transpose into the MXU
    ei = jax.lax.broadcasted_iota(jnp.int32, (cout, CPAD), 0)
    ej = jax.lax.broadcasted_iota(jnp.int32, (cout, CPAD), 1)
    emat = (ei == ej).astype(jnp.float32)

    par = params_ref[...]                                 # (2, CPAD): [gamma*scale; beta*scale]
    inv_count = 1.0 / count

    for b in range(b_tile):                               # static, small trip count
        xb = x[b * rows_b:(b + 1) * rows_b]               # (224, CPAD)

        # GroupNorm statistics (padded rows / padded channel lanes contribute exactly 0)
        s = jnp.sum(xb, axis=0, keepdims=True)            # (1, CPAD)
        ss = jnp.sum(xb * xb, axis=0, keepdims=True)      # (1, CPAD)
        stats = jnp.concatenate([s, ss], axis=0)          # (2, CPAD)
        g = jnp.dot(stats, gmat, preferred_element_type=jnp.float32)  # group-sum+broadcast
        gmean = g[0:1] * inv_count
        # one-pass variance; clamp at 0 for numerical safety (fine at this scale/tolerance)
        gvar = jnp.maximum(g[1:2] * inv_count - gmean * gmean, 0.0)
        a = jax.lax.rsqrt(gvar + EPS) * par[0:1]          # per-channel scale folded in
        bias = par[1:2] - gmean * a

        # streamed normalize + clamp + 2x2 max-pool: 4 pooling phases live in contiguous
        # 56-row slabs; keep a running max instead of materializing all of y.
        acc = jnp.clip(xb[0:rows_pad] * a + bias, CLAMP_MIN, CLAMP_MAX)
        for p in range(1, POOL * POOL):
            yp = jnp.clip(xb[p * rows_pad:(p + 1) * rows_pad] * a + bias,
                          CLAMP_MIN, CLAMP_MAX)
            acc = jnp.maximum(acc, yp)

        # channels-major output tile (Cout, rows_pad): transpose via tiny one-hot matmul
        o_ref[b] = jax.lax.dot_general(
            emat, acc, (((1,), (1,)), ((), ())),
            preferred_element_type=jnp.float32)


def _batch_dim_semantics():
    # v7x has two TensorCores per chip; CORE_PARALLEL shards the batch grid axis across
    # them.  Everywhere else plain "parallel" is the safe (near no-op) choice.
    try:
        kind = jax.devices()[0].device_kind.lower()
    except Exception:
        kind = ""
    if "v7" in kind and hasattr(pltpu, "CORE_PARALLEL"):
        return (pltpu.CORE_PARALLEL,)
    return ("parallel",)


@jax.jit
def model_forward(x, conv_w, conv_b, gamma, beta, scale):
    N, Cin, H, W = x.shape
    k = KERNEL_SIZE
    Ho, Wo = H - k + 1, W - k + 1                  # 14, 14
    Hp, Wp = Ho // POOL, Wo // POOL                # 7, 7
    Cout = conv_w.shape[0]
    K0 = Cin * k * k                               # 27
    HWp = Hp * Wp                                  # 49
    rows_pad = ((HWp + 7) // 8) * 8                # 49 -> 56 (8-aligned pooling phases)
    ROWS = POOL * POOL * rows_pad                  # 224
    ch_per_group = Cout // NUM_GROUPS

    # batch tiling: at most two grid steps (amortizes per-step overhead on single-TC
    # chips, keeps both v7x cores busy); capped so a patches block stays small in VMEM.
    B_tile = min(max(1, (N + 1) // 2), 128)
    G = (N + B_tile - 1) // B_tile
    N_pad = G * B_tile
    if N_pad > N:
        x = jnp.pad(x, ((0, N_pad - N), (0, 0), (0, 0), (0, 0)))

    # ---- im2col, pooling-phase-major: 9 static slices + one stack/reshape/transpose ----
    taps = [x[:, :, dh:dh + Ho, dw:dw + Wo]        # each (N_pad, Cin, Ho, Wo)
            for dh in range(k) for dw in range(k)]
    p = jnp.stack(taps, axis=-1)                   # (N_pad, Cin, Ho, Wo, k*k)
    p = p.reshape(N_pad, Cin, Hp, POOL, Wp, POOL, k * k)
    p = p.transpose(0, 3, 5, 2, 4, 1, 6)           # (N_pad, di, dj, Hp, Wp, Cin, k*k)
    p = p.reshape(N_pad, POOL * POOL, HWp, K0)     # K order = (cin, kh, kw) == OIHW flat
    ones_col = jnp.ones((N_pad, POOL * POOL, HWp, 1), jnp.float32)   # bias fold column
    p = jnp.concatenate([p, ones_col], axis=-1)    # (N_pad, 4, 49, K0+1)
    p = jnp.pad(p, ((0, 0), (0, 0), (0, rows_pad - HWp), (0, 0)))    # zero pad rows
    patches = p.reshape(N_pad, ROWS, K0 + 1)       # (N_pad, 224, 28)

    # ---- weights: bias appended as last row; channels zero-padded to CPAD lanes --------
    w_mat = jnp.concatenate([conv_w.reshape(Cout, K0).T,
                             conv_b.reshape(1, Cout)], axis=0)        # (K0+1, Cout)
    w_mat = jnp.pad(w_mat, ((0, 0), (0, CPAD - Cout)))                # (K0+1, CPAD)

    # ---- per-channel scale folded into the GroupNorm affine ----------------------------
    scale_f = scale.reshape(-1)
    params = jnp.stack([gamma * scale_f, beta * scale_f], axis=0)     # (2, Cout)
    params = jnp.pad(params, ((0, 0), (0, CPAD - Cout)))              # (2, CPAD)

    count = float(Ho * Wo * ch_per_group)
    kern = functools.partial(fused_kernel, count=count, rows_pad=rows_pad,
                             b_tile=B_tile, cout=Cout, ch_per_group=ch_per_group)
    flops = 2 * N_pad * ROWS * (K0 + 1) * CPAD
    bytes_accessed = (patches.size + w_mat.size + params.size
                      + N_pad * Cout * rows_pad) * 4

    out = pl.pallas_call(
        kern,
        out_shape=jax.ShapeDtypeStruct((N_pad, Cout, rows_pad), jnp.float32),
        grid_spec=pltpu.PrefetchScalarGridSpec(
            num_scalar_prefetch=0,
            grid=(G,),
            in_specs=[
                pl.BlockSpec((B_tile, ROWS, K0 + 1), lambda g: (g, 0, 0)),
                pl.BlockSpec((K0 + 1, CPAD), lambda g: (0, 0)),
                pl.BlockSpec((2, CPAD), lambda g: (0, 0)),
            ],
            out_specs=pl.BlockSpec((B_tile, Cout, rows_pad), lambda g: (g, 0, 0)),
        ),
        compiler_params=pltpu.CompilerParams(
            dimension_semantics=_batch_dim_semantics()),
        cost_estimate=pl.CostEstimate(flops=flops, transcendentals=N_pad * CPAD,
                                      bytes_accessed=bytes_accessed),
    )(patches, w_mat, params)

    # output is already channels-major: epilogue is a slice + reshape, no transpose.
    return out[:N, :, :HWp].reshape(N, Cout, Hp, Wp)


def reference(x, conv_w, conv_b, gamma, beta, scale):
    y = jax.lax.conv_general_dilated(
        x, conv_w, (1, 1), "VALID",
        dimension_numbers=("NCHW", "OIHW", "NCHW"))
    y = y + conv_b.reshape(1, -1, 1, 1)
    N, C, H, W = y.shape
    g = y.reshape(N, NUM_GROUPS, C // NUM_GROUPS, H, W)
    mean = g.mean(axis=(2, 3, 4), keepdims=True)
    var = g.var(axis=(2, 3, 4), keepdims=True)
    g = (g - mean) / jnp.sqrt(var + EPS)
    y = g.reshape(N, C, H, W) * gamma.reshape(1, -1, 1, 1) + beta.reshape(1, -1, 1, 1)
    y = jnp.clip(y * scale.reshape(1, -1, 1, 1), CLAMP_MIN, CLAMP_MAX)
    return y.reshape(N, C, H // POOL, POOL, W // POOL, POOL).max(axis=(3, 5))


if __name__ == "__main__":
    key = jax.random.PRNGKey(0)
    k1, k2, k3, k4, k5, k6 = jax.random.split(key, 6)
    N, H, W = 2, 16, 16
    x = jax.random.normal(k1, (N, IN_CHANNELS, H, W), jnp.float32)

    # deterministic parameter init (uniform in +-1/sqrt(fan_in), like nn.Conv2d)
    fan_in = IN_CHANNELS * KERNEL_SIZE * KERNEL_SIZE
    bound = 1.0 / np.sqrt(fan_in)
    conv_w = jax.random.uniform(
        k2, (OUT_CHANNELS, IN_CHANNELS, KERNEL_SIZE, KERNEL_SIZE),
        jnp.float32, -bound, bound)
    conv_b = jax.random.uniform(k3, (OUT_CHANNELS,), jnp.float32, -bound, bound)
    # non-trivial affine/scale values so the folded-affine path is actually exercised
    gamma = 1.0 + 0.1 * jax.random.normal(k4, (OUT_CHANNELS,), jnp.float32)
    beta = 0.1 * jax.random.normal(k5, (OUT_CHANNELS,), jnp.float32)
    scale = 1.0 + 0.1 * jax.random.normal(k6, (OUT_CHANNELS, 1, 1), jnp.float32)

    out = model_forward(x, conv_w, conv_b, gamma, beta, scale)
    jax.block_until_ready(out)

    ref = reference(x, conv_w, conv_b, gamma, beta, scale)
    assert out.shape == (N, OUT_CHANNELS, (H - KERNEL_SIZE + 1) // POOL,
                         (W - KERNEL_SIZE + 1) // POOL)
    np.testing.assert_allclose(np.asarray(out), np.asarray(ref),
                               rtol=1e-4, atol=1e-4)
    print("KERNEL_OK")
</pallas_src>

<mosaic_0001>
module attributes {stable_mosaic.version = 11 : i64} {
  func.func @fused_kernel(%arg0: i32, %arg1: memref<1x224x28xf32, #tpu.memory_space<vmem>>, %arg2: memref<28x128xf32, #tpu.memory_space<vmem>>, %arg3: memref<2x128xf32, #tpu.memory_space<vmem>>, %arg4: memref<1x16x56xf32, #tpu.memory_space<vmem>>) attributes {dimension_semantics = [#tpu.dimension_semantics<parallel>], iteration_bounds = array<i64: 2>, scalar_prefetch = 0 : i64, scratch_operands = 0 : i64, tpu.core_type = #tpu.core_type<tc>, window_params = [{transform_indices = @transform_0, window_bounds = array<i64: 1, 224, 28>}, {pipeline_mode = #tpu.pipeline_mode<synchronous>, transform_indices = @transform_1, window_bounds = array<i64: 28, 128>}, {pipeline_mode = #tpu.pipeline_mode<synchronous>, transform_indices = @transform_2, window_bounds = array<i64: 2, 128>}, {transform_indices = @transform_3, window_bounds = array<i64: 1, 16, 56>}]} {
    %c0 = arith.constant 0 : index
    %c0_0 = arith.constant 0 : index
    %c0_1 = arith.constant 0 : index
    %0 = vector.load %arg1[%c0, %c0_0, %c0_1] : memref<1x224x28xf32, #tpu.memory_space<vmem>>, vector<1x224x28xf32>
    %1 = vector.shape_cast %0 : vector<1x224x28xf32> to vector<224x28xf32>
    %c0_2 = arith.constant 0 : index
    %c0_3 = arith.constant 0 : index
    %2 = vector.load %arg2[%c0_2, %c0_3] : memref<28x128xf32, #tpu.memory_space<vmem>>, vector<28x128xf32>
    %cst = arith.constant dense<0.000000e+00> : vector<224x128xf32>
    %3 = tpu.matmul %1, %2, %cst {dimension_numbers = #tpu.dot_dimension_numbers<[1], [0], [0], [1], [0, 0, 1, 1], [], []>} : vector<224x28xf32>, vector<28x128xf32>, vector<224x128xf32> -> vector<224x128xf32>
    %4 = tpu.iota {dimensions = array<i32: 0>} : vector<128x128xi32>
    %5 = arith.sitofp %4 : vector<128x128xi32> to vector<128x128xf32>
    %6 = tpu.iota {dimensions = array<i32: 1>} : vector<128x128xi32>
    %7 = arith.sitofp %6 : vector<128x128xi32> to vector<128x128xf32>
    %cst_4 = arith.constant 5.000000e-01 : f32
    %8 = vector.broadcast %cst_4 : f32 to vector<128x128xf32>
    %9 = arith.mulf %5, %8 : vector<128x128xf32>
    %10 = math.floor %9 : vector<128x128xf32>
    %cst_5 = arith.constant 5.000000e-01 : f32
    %11 = vector.broadcast %cst_5 : f32 to vector<128x128xf32>
    %12 = arith.mulf %7, %11 : vector<128x128xf32>
    %13 = math.floor %12 : vector<128x128xf32>
    %14 = arith.cmpf oeq, %10, %13 : vector<128x128xf32>
    %15 = arith.extui %14 : vector<128x128xi1> to vector<128x128xi32>
    %16 = arith.sitofp %15 : vector<128x128xi32> to vector<128x128xf32>
    %17 = tpu.iota {dimensions = array<i32: 0>} : vector<16x128xi32>
    %18 = tpu.iota {dimensions = array<i32: 1>} : vector<16x128xi32>
    %19 = arith.cmpi eq, %17, %18 : vector<16x128xi32>
    %20 = arith.extui %19 : vector<16x128xi1> to vector<16x128xi32>
    %21 = arith.sitofp %20 : vector<16x128xi32> to vector<16x128xf32>
    %c0_6 = arith.constant 0 : index
    %c0_7 = arith.constant 0 : index
    %22 = vector.load %arg3[%c0_6, %c0_7] : memref<2x128xf32, #tpu.memory_space<vmem>>, vector<2x128xf32>
    %cst_8 = arith.constant dense<0.000000e+00> : vector<128xf32>
    %23 = vector.multi_reduction <add>, %3, %cst_8 [0] : vector<224x128xf32> to vector<128xf32>
    %24 = vector.shape_cast %23 : vector<128xf32> to vector<1x128xf32>
    %25 = arith.mulf %3, %3 : vector<224x128xf32>
    %cst_9 = arith.constant dense<0.000000e+00> : vector<128xf32>
    %26 = vector.multi_reduction <add>, %25, %cst_9 [0] : vector<224x128xf32> to vector<128xf32>
    %27 = vector.shape_cast %26 : vector<128xf32> to vector<1x128xf32>
    %28 = tpu.concatenate %24, %27 in 0 : vector<1x128xf32>, vector<1x128xf32> -> vector<2x128xf32>
    %cst_10 = arith.constant dense<0.000000e+00> : vector<2x128xf32>
    %29 = tpu.matmul %28, %16, %cst_10 {dimension_numbers = #tpu.dot_dimension_numbers<[1], [0], [0], [1], [0, 0, 1, 1], [], []>} : vector<2x128xf32>, vector<128x128xf32>, vector<2x128xf32> -> vector<2x128xf32>
    %30 = vector.extract_strided_slice %29 {offsets = [0, 0], sizes = [1, 128], strides = [1, 1]} : vector<2x128xf32> to vector<1x128xf32>
    %cst_11 = arith.constant 0.00255102036 : f32
    %31 = vector.broadcast %cst_11 : f32 to vector<1x128xf32>
    %32 = arith.mulf %30, %31 : vector<1x128xf32>
    %33 = vector.extract_strided_slice %29 {offsets = [1, 0], sizes = [1, 128], strides = [1, 1]} : vector<2x128xf32> to vector<1x128xf32>
    %cst_12 = arith.constant 0.00255102036 : f32
    %34 = vector.broadcast %cst_12 : f32 to vector<1x128xf32>
    %35 = arith.mulf %33, %34 : vector<1x128xf32>
    %36 = arith.mulf %32, %32 : vector<1x128xf32>
    %37 = arith.subf %35, %36 : vector<1x128xf32>
    %cst_13 = arith.constant 0.000000e+00 : f32
    %38 = vector.broadcast %cst_13 : f32 to vector<1x128xf32>
    %39 = arith.maximumf %37, %38 : vector<1x128xf32>
    %cst_14 = arith.constant 9.99999974E-6 : f32
    %40 = vector.broadcast %cst_14 : f32 to vector<1x128xf32>
    %41 = arith.addf %39, %40 : vector<1x128xf32>
    %42 = math.rsqrt %41 : vector<1x128xf32>
    %43 = vector.extract_strided_slice %22 {offsets = [0, 0], sizes = [1, 128], strides = [1, 1]} : vector<2x128xf32> to vector<1x128xf32>
    %44 = arith.mulf %42, %43 : vector<1x128xf32>
    %45 = vector.extract_strided_slice %22 {offsets = [1, 0], sizes = [1, 128], strides = [1, 1]} : vector<2x128xf32> to vector<1x128xf32>
    %46 = arith.mulf %32, %44 : vector<1x128xf32>
    %47 = arith.subf %45, %46 : vector<1x128xf32>
    %48 = vector.extract_strided_slice %3 {offsets = [0, 0], sizes = [56, 128], strides = [1, 1]} : vector<224x128xf32> to vector<56x128xf32>
    %49 = vector.broadcast %44 : vector<1x128xf32> to vector<56x128xf32>
    %50 = arith.mulf %48, %49 : vector<56x128xf32>
    %51 = vector.broadcast %47 : vector<1x128xf32> to vector<56x128xf32>
    %52 = arith.addf %50, %51 : vector<56x128xf32>
    %cst_15 = arith.constant 0.000000e+00 : f32
    %cst_16 = arith.constant 1.000000e+00 : f32
    %53 = vector.broadcast %cst_15 : f32 to vector<56x128xf32>
    %54 = arith.maximumf %53, %52 : vector<56x128xf32>
    %55 = vector.broadcast %cst_16 : f32 to vector<56x128xf32>
    %56 = arith.minimumf %55, %54 : vector<56x128xf32>
    %57 = vector.extract_strided_slice %3 {offsets = [56, 0], sizes = [56, 128], strides = [1, 1]} : vector<224x128xf32> to vector<56x128xf32>
    %58 = vector.broadcast %44 : vector<1x128xf32> to vector<56x128xf32>
    %59 = arith.mulf %57, %58 : vector<56x128xf32>
    %60 = vector.broadcast %47 : vector<1x128xf32> to vector<56x128xf32>
    %61 = arith.addf %59, %60 : vector<56x128xf32>
    %cst_17 = arith.constant 0.000000e+00 : f32
    %cst_18 = arith.constant 1.000000e+00 : f32
    %62 = vector.broadcast %cst_17 : f32 to vector<56x128xf32>
    %63 = arith.maximumf %62, %61 : vector<56x128xf32>
    %64 = vector.broadcast %cst_18 : f32 to vector<56x128xf32>
    %65 = arith.minimumf %64, %63 : vector<56x128xf32>
    %66 = arith.maximumf %56, %65 : vector<56x128xf32>
    %67 = vector.extract_strided_slice %3 {offsets = [112, 0], sizes = [56, 128], strides = [1, 1]} : vector<224x128xf32> to vector<56x128xf32>
    %68 = vector.broadcast %44 : vector<1x128xf32> to vector<56x128xf32>
    %69 = arith.mulf %67, %68 : vector<56x128xf32>
    %70 = vector.broadcast %47 : vector<1x128xf32> to vector<56x128xf32>
    %71 = arith.addf %69, %70 : vector<56x128xf32>
    %cst_19 = arith.constant 0.000000e+00 : f32
    %cst_20 = arith.constant 1.000000e+00 : f32
    %72 = vector.broadcast %cst_19 : f32 to vector<56x128xf32>
    %73 = arith.maximumf %72, %71 : vector<56x128xf32>
    %74 = vector.broadcast %cst_20 : f32 to vector<56x128xf32>
    %75 = arith.minimumf %74, %73 : vector<56x128xf32>
    %76 = arith.maximumf %66, %75 : vector<56x128xf32>
    %77 = vector.extract_strided_slice %3 {offsets = [168, 0], sizes = [56, 128], strides = [1, 1]} : vector<224x128xf32> to vector<56x128xf32>
    %78 = vector.broadcast %44 : vector<1x128xf32> to vector<56x128xf32>
    %79 = arith.mulf %77, %78 : vector<56x128xf32>
    %80 = vector.broadcast %47 : vector<1x128xf32> to vector<56x128xf32>
    %81 = arith.addf %79, %80 : vector<56x128xf32>
    %cst_21 = arith.constant 0.000000e+00 : f32
    %cst_22 = arith.constant 1.000000e+00 : f32
    %82 = vector.broadcast %cst_21 : f32 to vector<56x128xf32>
    %83 = arith.maximumf %82, %81 : vector<56x128xf32>
    %84 = vector.broadcast %cst_22 : f32 to vector<56x128xf32>
    %85 = arith.minimumf %84, %83 : vector<56x128xf32>
    %86 = arith.maximumf %76, %85 : vector<56x128xf32>
    %cst_23 = arith.constant dense<0.000000e+00> : vector<16x56xf32>
    %87 = tpu.matmul %21, %86, %cst_23 {dimension_numbers = #tpu.dot_dimension_numbers<[1], [1], [0], [0], [0, 0, 1, 0], [], []>} : vector<16x128xf32>, vector<56x128xf32>, vector<16x56xf32> -> vector<16x56xf32>
    %c0_24 = arith.constant 0 : index
    %c0_25 = arith.constant 0 : index
    %c0_26 = arith.constant 0 : index
    %88 = vector.load %arg4[%c0_24, %c0_25, %c0_26] : memref<1x16x56xf32, #tpu.memory_space<vmem>>, vector<1x16x56xf32>
    %89 = vector.shape_cast %88 : vector<1x16x56xf32> to vector<16x56xf32>
    %90 = vector.shape_cast %87 : vector<16x56xf32> to vector<1x16x56xf32>
    tpu.vector_store %arg4[%c0_24, %c0_25, %c0_26], %90 {strides = array<i32>} : memref<1x16x56xf32, #tpu.memory_space<vmem>>, vector<1x16x56xf32>,
    return
  }
  func.func @transform_0(%arg0: i32) -> (i32, i32, i32) {
    %c0_i32 = arith.constant 0 : i32
    %c0_i32_0 = arith.constant 0 : i32
    %c0_i32_1 = arith.constant 0 : i32
    return %arg0, %c0_i32, %c0_i32_0 : i32, i32, i32
  }
  func.func @transform_1(%arg0: i32) -> (i32, i32) {
    %c0_i32 = arith.constant 0 : i32
    %c0_i32_0 = arith.constant 0 : i32
    %c0_i32_1 = arith.constant 0 : i32
    return %c0_i32, %c0_i32_0 : i32, i32
  }
  func.func @transform_2(%arg0: i32) -> (i32, i32) {
    %c0_i32 = arith.constant 0 : i32
    %c0_i32_0 = arith.constant 0 : i32
    %c0_i32_1 = arith.constant 0 : i32
    return %c0_i32, %c0_i32_0 : i32, i32
  }
  func.func @transform_3(%arg0: i32) -> (i32, i32, i32) {
    %c0_i32 = arith.constant 0 : i32
    %c0_i32_0 = arith.constant 0 : i32
    %c0_i32_1 = arith.constant 0 : i32
    return %arg0, %c0_i32, %c0_i32_0 : i32, i32, i32
  }
}

</mosaic_0001>

<llo_original>
// kernel: model_forward.1
$region0: #{model_forward.1}
  #allocation0 [shape = 'u32[]', space=smem, size = 0x4, offset = 0x4, fixed_abs, tag = 'smem constant byte address 0x4 - core index']
  #allocation1 [shape = 'u32[72,128]{1,0:T(1,128)}', space=vmem, size = 0x9000, scoped, tag = 'internal scratch']
  %s0 = inlined_call_operand.vmem [shape: f32[2,224,28], index: 0, kind: input, shape index: {}]
  %s1 = inlined_call_operand.vmem [shape: f32[28,128], index: 1, kind: input, shape index: {}]
  %s2 = inlined_call_operand.vmem [shape: f32[2,128], index: 2, kind: input, shape index: {}]
  %s3 = inlined_call_operand.vmem [shape: f32[2,16,56], index: 3, kind: output, shape index: {}]
  %s4 = sld [smem:[#allocation0]]
  $region45: #{model_forward.1} parent=0
    _
  %s6 = ssub.s32 1, %s4
  %s7 = scalar_select 0, %s6, %s4
  loop: start=0, step=1, limit=4
  $region2: #{model_forward.1} parent=0 // loop_pre_header
    _
  $region3: #{model_forward.1} parent=0 // loop_header
    %s9 = sphi 0, %s13
    %p10 = scmp.ge.s32.totalorder %s9, 4
    %s19 = sphi 0, %s21
    %s22 = sphi 0, %s19
    %s23 = sphi 0, %s22
    %s39 = sphi 0, %s23
    %s43 = sphi 0, %s43
    %s45 = sphi 0, %s43
    %s46 = sphi 0, %s45
    %s60 = sphi 0, %s46
    %s64 = sphi 0, %s64
    %s66 = sphi 0, %s64
    %s67 = sphi 0, %s66
    %s81 = sphi 0, %s67
    %s87 = sphi 0, %s89
    %s90 = sphi 0, %s87
    %s91 = sphi 0, %s90
    %s107 = sphi 0, %s91
  $region4: #{model_forward.1} parent=0 // loop_header_branch
    %12 = sbr.rel (%p10) target = $region8
  $region5: #{model_forward.1} parent=0 // loop_body
    %s14 = ssub.s32 %s9, 1
    %s15 = ssub.s32 %s9, 2
    %s16 = sadd.s32 %s9, 1
    %s17 = ssub.s32 %s9, %s16
    %p18 = scmp.eq.s32.totalorder %s17, 0
    %s20 = sadd.s32 %s19, 1
    %s21 = scalar_select %p18, %s19, %s20
    %p24 = pneg %p18
    %p25 = scmp.eq.s32.totalorder %s9, 1
    %p26 = por %p24, %p25
    %p27 = scmp.ne.s32.totalorder %s19, %s22
    %p28 = scmp.eq.s32.totalorder %s9, 0
    %p29 = por %p27, %p28
    %p30 = scmp.ne.s32.totalorder %s19, %s22
    %p31 = scmp.eq.s32.totalorder %s14, 1
    %p32 = por %p30, %p31
    %p33 = scmp.ne.s32.totalorder %s22, %s23
    %p34 = scmp.eq.s32.totalorder %s14, 0
    %p35 = por %p33, %p34
    %p36 = scmp.ne.s32.totalorder %s22, %s23
    %p37 = scmp.eq.s32.totalorder %s15, 1
    %p38 = por %p36, %p37
    %p40 = scmp.ne.s32.totalorder %s23, %s39
    %p41 = scmp.eq.s32.totalorder %s15, 0
    %p42 = por %p40, %p41
    %s44 = sadd.s32 %s43, 1
    %p47 = scmp.eq.s32.totalorder %s9, 1
    %p48 = scmp.ne.s32.totalorder %s43, %s45
    %p49 = scmp.eq.s32.totalorder %s9, 0
    %p50 = por %p48, %p49
    %p51 = scmp.ne.s32.totalorder %s43, %s45
    %p52 = scmp.eq.s32.totalorder %s14, 1
    %p53 = por %p51, %p52
    %p54 = scmp.ne.s32.totalorder %s45, %s46
    %p55 = scmp.eq.s32.totalorder %s14, 0
    %p56 = por %p54, %p55
    %p57 = scmp.ne.s32.totalorder %s45, %s46
    %p58 = scmp.eq.s32.totalorder %s15, 1
    %p59 = por %p57, %p58
    %p61 = scmp.ne.s32.totalorder %s46, %s60
    %p62 = scmp.eq.s32.totalorder %s15, 0
    %p63 = por %p61, %p62
    %s65 = sadd.s32 %s64, 1
    %p68 = scmp.eq.s32.totalorder %s9, 1
    %p69 = scmp.ne.s32.totalorder %s64, %s66
    %p70 = scmp.eq.s32.totalorder %s9, 0
    %p71 = por %p69, %p70
    %p72 = scmp.ne.s32.totalorder %s64, %s66
    %p73 = scmp.eq.s32.totalorder %s14, 1
    %p74 = por %p72, %p73
    %p75 = scmp.ne.s32.totalorder %s66, %s67
    %p76 = scmp.eq.s32.totalorder %s14, 0
    %p77 = por %p75, %p76
    %p78 = scmp.ne.s32.totalorder %s66, %s67
    %p79 = scmp.eq.s32.totalorder %s15, 1
    %p80 = por %p78, %p79
    %p82 = scmp.ne.s32.totalorder %s67, %s81
    %p83 = scmp.eq.s32.totalorder %s15, 0
    %p84 = por %p82, %p83
    %s85 = ssub.s32 %s9, %s16
    %p86 = scmp.eq.s32.totalorder %s85, 0
    %s88 = sadd.s32 %s87, 1
    %s89 = scalar_select %p86, %s87, %s88
    %p92 = pneg %p86
    %p93 = scmp.eq.s32.totalorder %s9, 1
    %p94 = por %p92, %p93
    %p95 = scmp.ne.s32.totalorder %s87, %s90
    %p96 = scmp.eq.s32.totalorder %s9, 0
    %p97 = por %p95, %p96
    %p98 = scmp.ne.s32.totalorder %s87, %s90
    %p99 = scmp.eq.s32.totalorder %s14, 1
    %p100 = por %p98, %p99
    %p101 = scmp.ne.s32.totalorder %s90, %s91
    %p102 = scmp.eq.s32.totalorder %s14, 0
    %p103 = por %p101, %p102
    %p104 = scmp.ne.s32.totalorder %s90, %s91
    %p105 = scmp.eq.s32.totalorder %s15, 1
    %p106 = por %p104, %p105
    %p108 = scmp.ne.s32.totalorder %s91, %s107
    %p109 = scmp.eq.s32.totalorder %s15, 0
    %p110 = por %p108, %p109
    %p111 = scmp.le.s32.totalorder 1, %s9
    %p112 = scmp.lt.s32.totalorder %s9, 3
    %p113 = pnand %p111, %p112
    %p114 = pneg %p113
    // Predicated region
    $region9: #{model_forward.1} parent=5 // pred_check
      _
    $region10: #{model_forward.1} parent=5 // pred_check_branch
      %116 = sbr.rel (%p113) target = $region12
    $region11: #{model_forward.1} parent=5 // pred_region
      %s117 = ssub.s32 %s9, 1
      // Predicated region
      $region13: #{model_forward.1} parent=11 // pred_check
        %p118 = pneg %p56
      $region14: #{model_forward.1} parent=11 // pred_check_branch
        %120 = sbr.rel (%p118) target = $region16
      $region15: #{model_forward.1} parent=11 // pred_region
        _
      $region16: #{model_forward.1} parent=11 // pred_fallthru
        _
      // Predicated region
      $region17: #{model_forward.1} parent=11 // pred_check
        %p121 = pneg %p77
      $region18: #{model_forward.1} parent=11 // pred_check_branch
        %123 = sbr.rel (%p121) target = $region20
      $region19: #{model_forward.1} parent=11 // pred_region
        _
      $region20: #{model_forward.1} parent=11 // pred_fallthru
        _
    $region12: #{model_forward.1} parent=5 // pred_fallthru
      _
    %p124 = scmp.lt.s32.totalorder %s9, 2
    // Predicated region
    $region21: #{model_forward.1} parent=5 // pred_check
      %p125 = pneg %p124
    $region22: #{model_forward.1} parent=5 // pred_check_branch
      %127 = sbr.rel (%p125) target = $region24
    $region23: #{model_forward.1} parent=5 // pred_region
      // Predicated region
      $region25: #{model_forward.1} parent=23 // pred_check
        %p128 = pneg %p29
      $region26: #{model_forward.1} parent=23 // pred_check_branch
        %130 = sbr.rel (%p128) target = $region28
      $region27: #{model_forward.1} parent=23 // pred_region
        %p131 = scmp.lt.s32.totalorder %s9, 1
        %s132 = scalar_select %p131, %s9, 1
        %s133 = smul.addr %s132, 28
        %s134 = smul.addr %s133, 8
        %s135 = scalar_lea.vmem %s0, %s134
      $region28: #{model_forward.1} parent=23 // pred_fallthru
        _
    $region24: #{model_forward.1} parent=5 // pred_fallthru
      _
    %p136 = scmp.le.s32.totalorder 1, %s9
    %p137 = scmp.lt.s32.totalorder %s9, 3
    %p138 = pnand %p136, %p137
    %p139 = pneg %p138
    // Predicated region
    $region29: #{model_forward.1} parent=5 // pred_check
      _
    $region30: #{model_forward.1} parent=5 // pred_check_branch
      %141 = sbr.rel (%p138) target = $region32
    $region31: #{model_forward.1} parent=5 // pred_region
      %s142 = ssub.s32 %s9, 1
      %p143 = scmp.lt.s32.totalorder %s14, 1
      %s144 = scalar_select %p143, %s14, 1
      %s145 = smul.addr %s144, 28
      %s146 = smul.addr %s145, 8
      %s147 = scalar_lea.vmem %s0, %s146
      %p148 = pneg %p35
      %p149 = pneg %p32
      %p150 = pneg %p56
      %p151 = pneg %p53
      %p152 = pneg %p77
      %p153 = pneg %p74
      %p154 = pneg %p103
      %p155 = pneg %p100
      %p156 = scmp.lt.s32.totalorder %s14, 1
      %s157 = scalar_select %p156, %s14, 1
      %s158 = smul.addr %s157, 2
      %s159 = smul.addr %s158, 8
      %s160 = scalar_lea.vmem %s3, %s159
      %p161 = scmp.lt.s32.totalorder %s14, 1
      %s162 = scalar_select %p161, %s14, 1
      %s163 = smul.addr %s162, 28
      %s164 = smul.addr %s163, 8
      %s165 = scalar_lea.vmem %s0, %s164
      %p166 = scmp.lt.s32.totalorder %s14, 1
      %s167 = scalar_select %p166, %s14, 1
      %s168 = smul.addr %s167, 2
      %s169 = smul.addr %s168, 8
      %s170 = scalar_lea.vmem %s3, %s169
      %v171 = vld [vmem:[%s165] sm:$0xff]
      %v172 = vld [vmem:[%s165 + $0x8] sm:$0xff]
      %v173 = vld [vmem:[%s165 + $0x10] sm:$0xff]
      %v174 = vld [vmem:[%s165 + $0x18] sm:$0xff]
      %v175 = vld [vmem:[%s165 + $0x20] sm:$0xff]
      %v176 = vld [vmem:[%s165 + $0x28] sm:$0xff]
      %v177 = vld [vmem:[%s165 + $0x30] sm:$0xff]
      %v178 = vld [vmem:[%s165 + $0x38] sm:$0xff]
      %v179 = vld [vmem:[%s165 + $0x40] sm:$0xff]
      %v180 = vld [vmem:[%s165 + $0x48] sm:$0xff]
      %v181 = vld [vmem:[%s165 + $0x50] sm:$0xff]
      %v182 = vld [vmem:[%s165 + $0x58] sm:$0xff]
      %v183 = vld [vmem:[%s165 + $0x60] sm:$0xff]
      %v184 = vld [vmem:[%s165 + $0x68] sm:$0xff]
      %v185 = vld [vmem:[%s165 + $0x70] sm:$0xff]
      %v186 = vld [vmem:[%s165 + $0x78] sm:$0xff]
      %v187 = vld [vmem:[%s165 + $0x80] sm:$0xff]
      %v188 = vld [vmem:[%s165 + $0x88] sm:$0xff]
      %v189 = vld [vmem:[%s165 + $0x90] sm:$0xff]
      %v190 = vld [vmem:[%s165 + $0x98] sm:$0xff]
      %v191 = vld [vmem:[%s165 + $0xa0] sm:$0xff]
      %v192 = vld [vmem:[%s165 + $0xa8] sm:$0xff]
      %v193 = vld [vmem:[%s165 + $0xb0] sm:$0xff]
      %v194 = vld [vmem:[%s165 + $0xb8] sm:$0xff]
      %v195 = vld [vmem:[%s165 + $0xc0] sm:$0xff]
      %v196 = vld [vmem:[%s165 + $0xc8] sm:$0xff]
      %v197 = vld [vmem:[%s165 + $0xd0] sm:$0xff]
      %v198 = vld [vmem:[%s165 + $0xd8] sm:$0xff]
      %v199 = vld [vmem:[%s1] sm:$0xff]
      %v200 = vld [vmem:[%s1 + $0x8] sm:$0xff]
      %v201 = vld [vmem:[%s1 + $0x10] sm:$0xff]
      %v202 = vld [vmem:[%s1 + $0x18] sm:$0xf]
      %vm203 = vcmask 228352
      %v205 = vsel %vm203, %v171, 0
      %v208 = vsel %vm203, %v172, 0
      %v211 = vsel %vm203, %v173, 0
      %v214 = vsel %vm203, %v174, 0
      %v217 = vsel %vm203, %v175, 0
      %v220 = vsel %vm203, %v176, 0
      %v223 = vsel %vm203, %v177, 0
      %v226 = vsel %vm203, %v178, 0
      %v229 = vsel %vm203, %v179, 0
      %v232 = vsel %vm203, %v180, 0
      %v235 = vsel %vm203, %v181, 0
      %v238 = vsel %vm203, %v182, 0
      %v241 = vsel %vm203, %v183, 0
      %v244 = vsel %vm203, %v184, 0
      %v247 = vsel %vm203, %v185, 0
      %v250 = vsel %vm203, %v186, 0
      %v253 = vsel %vm203, %v187, 0
      %v256 = vsel %vm203, %v188, 0
      %v259 = vsel %vm203, %v189, 0
      %v262 = vsel %vm203, %v190, 0
      %v265 = vsel %vm203, %v191, 0
      %v268 = vsel %vm203, %v192, 0
      %v271 = vsel %vm203, %v193, 0
      %v274 = vsel %vm203, %v194, 0
      %v277 = vsel %vm203, %v195, 0
      %v280 = vsel %vm203, %v196, 0
      %v283 = vsel %vm203, %v197, 0
      %v286 = vsel %vm203, %v198, 0
      %vm288 = vcmask 1043456
      %v290 = vsel %vm288, %v202, 0
      %292 = vmatpush.msra.mxu0 0.0
      %293 = vmatpush.msra.mxu0 0.0
      %294 = vmatpush.msra.mxu0 0.0
      %295 = vmatpush.msra.mxu0 0.0
      %296 = vmatpush.msra.mxu0 0.0
      %297 = vmatpush.msra.mxu0 0.0
      %298 = vmatpush.msra.mxu0 0.0
      %299 = vmatpush.msra.mxu0 0.0
      %300 = vmatpush.msra.mxu0 0.0
      %301 = vmatpush.msra.mxu0 0.0
      %302 = vmatpush.msra.mxu0 0.0
      %303 = vmatpush.msra.mxu0 0.0
      %304 = vmatpush.msra.mxu0 %v290
      %305 = vmatpush.msra.mxu0 %v201
      %306 = vmatpush.msra.mxu0 %v200
      %307 = vmatpush.msra.mxu0 %v199
      %308 = vmatmul.f32.gmra.mxu0 %v205
      %v309 = vpop.f32.mrf.mxu0
      %v310 = vadd.f32 0.0, %v309
      %311 = vmatmul.f32.gmra.mxu0 %v208
      %v312 = vpop.f32.mrf.mxu0
      %v313 = vadd.f32 0.0, %v312
      %314 = vmatmul.f32.gmra.mxu0 %v211
      %v315 = vpop.f32.mrf.mxu0
      %v316 = vadd.f32 0.0, %v315
      %317 = vmatmul.f32.gmra.mxu0 %v214
      %v318 = vpop.f32.mrf.mxu0
      %v319 = vadd.f32 0.0, %v318
      %320 = vmatmul.f32.gmra.mxu0 %v217
      %v321 = vpop.f32.mrf.mxu0
      %v322 = vadd.f32 0.0, %v321
      %323 = vmatmul.f32.gmra.mxu0 %v220
      %v324 = vpop.f32.mrf.mxu0
      %v325 = vadd.f32 0.0, %v324
      %326 = vmatmul.f32.gmra.mxu0 %v223
      %v327 = vpop.f32.mrf.mxu0
      %v328 = vadd.f32 0.0, %v327
      %329 = vmatmul.f32.gmra.mxu0 %v226
      %v330 = vpop.f32.mrf.mxu0
      %v331 = vadd.f32 0.0, %v330
      %332 = vmatmul.f32.gmra.mxu0 %v229
      %v333 = vpop.f32.mrf.mxu0
      %v334 = vadd.f32 0.0, %v333
      %335 = vmatmul.f32.gmra.mxu0 %v232
      %v336 = vpop.f32.mrf.mxu0
      %v337 = vadd.f32 0.0, %v336
      %338 = vmatmul.f32.gmra.mxu0 %v235
      %v339 = vpop.f32.mrf.mxu0
      %v340 = vadd.f32 0.0, %v339
      %341 = vmatmul.f32.gmra.mxu0 %v238
      %v342 = vpop.f32.mrf.mxu0
      %v343 = vadd.f32 0.0, %v342
      %344 = vmatmul.f32.gmra.mxu0 %v241
      %v345 = vpop.f32.mrf.mxu0
      %v346 = vadd.f32 0.0, %v345
      %347 = vmatmul.f32.gmra.mxu0 %v244
      %v348 = vpop.f32.mrf.mxu0
      %v349 = vadd.f32 0.0, %v348
      %350 = vmatmul.f32.gmra.mxu0 %v247
      %v351 = vpop.f32.mrf.mxu0
      %v352 = vadd.f32 0.0, %v351
      %353 = vmatmul.f32.gmra.mxu0 %v250
      %v354 = vpop.f32.mrf.mxu0
      %v355 = vadd.f32 0.0, %v354
      %356 = vmatmul.f32.gmra.mxu0 %v253
      %v357 = vpop.f32.mrf.mxu0
      %v358 = vadd.f32 0.0, %v357
      %359 = vmatmul.f32.gmra.mxu0 %v256
      %v360 = vpop.f32.mrf.mxu0
      %v361 = vadd.f32 0.0, %v360
      %362 = vmatmul.f32.gmra.mxu0 %v259
      %v363 = vpop.f32.mrf.mxu0
      %v364 = vadd.f32 0.0, %v363
      %365 = vmatmul.f32.gmra.mxu0 %v262
      %v366 = vpop.f32.mrf.mxu0
      %v367 = vadd.f32 0.0, %v366
      %368 = vmatmul.f32.gmra.mxu0 %v265
      %v369 = vpop.f32.mrf.mxu0
      %v370 = vadd.f32 0.0, %v369
      %371 = vmatmul.f32.gmra.mxu0 %v268
      %v372 = vpop.f32.mrf.mxu0
      %v373 = vadd.f32 0.0, %v372
      %374 = vmatmul.f32.gmra.mxu0 %v271
      %v375 = vpop.f32.mrf.mxu0
      %v376 = vadd.f32 0.0, %v375
      %377 = vmatmul.f32.gmra.mxu0 %v274
      %v378 = vpop.f32.mrf.mxu0
      %v379 = vadd.f32 0.0, %v378
      %380 = vmatmul.f32.gmra.mxu0 %v277
      %v381 = vpop.f32.mrf.mxu0
      %v382 = vadd.f32 0.0, %v381
      %383 = vmatmul.f32.gmra.mxu0 %v280
      %v384 = vpop.f32.mrf.mxu0
      %v385 = vadd.f32 0.0, %v384
      %386 = vmatmul.f32.gmra.mxu0 %v283
      %v387 = vpop.f32.mrf.mxu0
      %v388 = vadd.f32 0.0, %v387
      %389 = vmatmul.f32.gmra.mxu0 %v286
      %v390 = vpop.f32.mrf.mxu0
      %v391 = vadd.f32 0.0, %v390
      %392 = vdwg.mxu0
      %v393 = vlaneseq
      %v394 = vshrl.u32 %v393, 7
      %v395 = vadd.s32 %v394, 8
      %v396 = vadd.s32 %v394, 16
      %v397 = vadd.s32 %v394, 24
      %v398 = vadd.s32 %v394, 32
      %v399 = vadd.s32 %v394, 40
      %v400 = vadd.s32 %v394, 48
      %v401 = vadd.s32 %v394, 56
      %v402 = vadd.s32 %v394, 64
      %v403 = vadd.s32 %v394, 72
      %v404 = vadd.s32 %v394, 80
      %v405 = vadd.s32 %v394, 88
      %v406 = vadd.s32 %v394, 96
      %v407 = vadd.s32 %v394, 104
      %v408 = vadd.s32 %v394, 112
      %v409 = vadd.s32 %v394, 120
      %v410 = vcvt.s32.f32 %v394
      %v411 = vcvt.s32.f32 %v395
      %v412 = vcvt.s32.f32 %v396
      %v413 = vcvt.s32.f32 %v397
      %v414 = vcvt.s32.f32 %v398
      %v415 = vcvt.s32.f32 %v399
      %v416 = vcvt.s32.f32 %v400
      %v417 = vcvt.s32.f32 %v401
      %v418 = vcvt.s32.f32 %v402
      %v419 = vcvt.s32.f32 %v403
      %v420 = vcvt.s32.f32 %v404
      %v421 = vcvt.s32.f32 %v405
      %v422 = vcvt.s32.f32 %v406
      %v423 = vcvt.s32.f32 %v407
      %v424 = vcvt.s32.f32 %v408
      %v425 = vcvt.s32.f32 %v409
      %v426 = vlaneseq
      %v427 = vand.u32 %v426, 127
      %v428 = vcvt.s32.f32 %v427
      %v429 = vmul.f32 %v410, 0.5
      %v430 = vmul.f32 %v411, 0.5
      %v431 = vmul.f32 %v412, 0.5
      %v432 = vmul.f32 %v413, 0.5
      %v433 = vmul.f32 %v414, 0.5
      %v434 = vmul.f32 %v415, 0.5
      %v435 = vmul.f32 %v416, 0.5
      %v436 = vmul.f32 %v417, 0.5
      %v437 = vmul.f32 %v418, 0.5
      %v438 = vmul.f32 %v419, 0.5
      %v439 = vmul.f32 %v420, 0.5
      %v440 = vmul.f32 %v421, 0.5
      %v441 = vmul.f32 %v422, 0.5
      %v442 = vmul.f32 %v423, 0.5
      %v443 = vmul.f32 %v424, 0.5
      %v444 = vmul.f32 %v425, 0.5
      %v445 = vfloor.f32 %v429
      %v446 = vfloor.f32 %v430
      %v447 = vfloor.f32 %v431
      %v448 = vfloor.f32 %v432
      %v449 = vfloor.f32 %v433
      %v450 = vfloor.f32 %v434
      %v451 = vfloor.f32 %v435
      %v452 = vfloor.f32 %v436
      %v453 = vfloor.f32 %v437
      %v454 = vfloor.f32 %v438
      %v455 = vfloor.f32 %v439
      %v456 = vfloor.f32 %v440
      %v457 = vfloor.f32 %v441
      %v458 = vfloor.f32 %v442
      %v459 = vfloor.f32 %v443
      %v460 = vfloor.f32 %v444
      %v461 = vmul.f32 %v428, 0.5
      %v462 = vfloor.f32 %v461
      %vm463 = vcmp.eq.f32.partialorder %v445, %v462
      %vm464 = vcmp.eq.f32.partialorder %v446, %v462
      %vm465 = vcmp.eq.f32.partialorder %v447, %v462
      %vm466 = vcmp.eq.f32.partialorder %v448, %v462
      %vm467 = vcmp.eq.f32.partialorder %v449, %v462
      %vm468 = vcmp.eq.f32.partialorder %v450, %v462
      %vm469 = vcmp.eq.f32.partialorder %v451, %v462
      %vm470 = vcmp.eq.f32.partialorder %v452, %v462
      %vm471 = vcmp.eq.f32.partialorder %v453, %v462
      %vm472 = vcmp.eq.f32.partialorder %v454, %v462
      %vm473 = vcmp.eq.f32.partialorder %v455, %v462
      %vm474 = vcmp.eq.f32.partialorder %v456, %v462
      %vm475 = vcmp.eq.f32.partialorder %v457, %v462
      %vm476 = vcmp.eq.f32.partialorder %v458, %v462
      %vm477 = vcmp.eq.f32.partialorder %v459, %v462
      %vm478 = vcmp.eq.f32.partialorder %v460, %v462
      %v479 = vsel %vm463, 1, 0
      %v480 = vsel %vm464, 1, 0
      %v481 = vsel %vm465, 1, 0
      %v482 = vsel %vm466, 1, 0
      %v483 = vsel %vm467, 1, 0
      %v484 = vsel %vm468, 1, 0
      %v485 = vsel %vm469, 1, 0
      %v486 = vsel %vm470, 1, 0
      %v487 = vsel %vm471, 1, 0
      %v488 = vsel %vm472, 1, 0
      %v489 = vsel %vm473, 1, 0
      %v490 = vsel %vm474, 1, 0
      %v491 = vsel %vm475, 1, 0
      %v492 = vsel %vm476, 1, 0
      %v493 = vsel %vm477, 1, 0
      %v494 = vsel %vm478, 1, 0
      %v495 = vcvt.s32.f32 %v479
      %v496 = vcvt.s32.f32 %v480
      %v497 = vcvt.s32.f32 %v481
      %v498 = vcvt.s32.f32 %v482
      %v499 = vcvt.s32.f32 %v483
      %v500 = vcvt.s32.f32 %v484
      %v501 = vcvt.s32.f32 %v485
      %v502 = vcvt.s32.f32 %v486
      %v503 = vcvt.s32.f32 %v487
      %v504 = vcvt.s32.f32 %v488
      %v505 = vcvt.s32.f32 %v489
      %v506 = vcvt.s32.f32 %v490
      %v507 = vcvt.s32.f32 %v491
      %v508 = vcvt.s32.f32 %v492
      %v509 = vcvt.s32.f32 %v493
      %v510 = vcvt.s32.f32 %v494
      %vm511 = vcmp.eq.s32.totalorder %v394, %v427
      %vm512 = vcmp.eq.s32.totalorder %v395, %v427
      %v513 = vsel %vm511, 1, 0
      %v514 = vsel %vm512, 1, 0
      %v515 = vcvt.s32.f32 %v513
      %v516 = vcvt.s32.f32 %v514
      %v517 = vld [vmem:[%s2] sm:$0x3]
      %v518 = vadd.f32 %v310, %v313
      %v519 = vadd.f32 %v518, %v316
      %v520 = vadd.f32 %v519, %v319
      %v521 = vadd.f32 %v520, %v322
      %v522 = vadd.f32 %v521, %v325
      %v523 = vadd.f32 %v522, %v328
      %v524 = vadd.f32 %v523, %v331
      %v525 = vadd.f32 %v524, %v334
      %v526 = vadd.f32 %v525, %v337
      %v527 = vadd.f32 %v526, %v340
      %v528 = vadd.f32 %v527, %v343
      %v529 = vadd.f32 %v528, %v346
      %v530 = vadd.f32 %v529, %v349
      %v531 = vadd.f32 %v530, %v352
      %v532 = vadd.f32 %v531, %v355
      %v533 = vadd.f32 %v532, %v358
      %v534 = vadd.f32 %v533, %v361
      %v535 = vadd.f32 %v534, %v364
      %v536 = vadd.f32 %v535, %v367
      %v537 = vadd.f32 %v536, %v370
      %v538 = vadd.f32 %v537, %v373
      %v539 = vadd.f32 %v538, %v376
      %v540 = vadd.f32 %v539, %v379
      %v541 = vadd.f32 %v540, %v382
      %v542 = vadd.f32 %v541, %v385
      %v543 = vadd.f32 %v542, %v388
      %v544 = vadd.f32 %v543, %v391
      %v545 = vrot.slane %v544, 4
      %v546 = vadd.f32 %v544, %v545
      %v547 = vrot.slane %v546, 2
      %v548 = vadd.f32 %v546, %v547
      %v549 = vrot.slane %v548, 1
      %v550 = vadd.f32 %v548, %v549
      %v551 = vmul.f32 %v310, %v310
      %v552 = vmul.f32 %v313, %v313
      %v553 = vmul.f32 %v316, %v316
      %v554 = vmul.f32 %v319, %v319
      %v555 = vmul.f32 %v322, %v322
      %v556 = vmul.f32 %v325, %v325
      %v557 = vmul.f32 %v328, %v328
      %v558 = vmul.f32 %v331, %v331
      %v559 = vmul.f32 %v334, %v334
      %v560 = vmul.f32 %v337, %v337
      %v561 = vmul.f32 %v340, %v340
      %v562 = vmul.f32 %v343, %v343
      %v563 = vmul.f32 %v346, %v346
      %v564 = vmul.f32 %v349, %v349
      %v565 = vmul.f32 %v352, %v352
      %v566 = vmul.f32 %v355, %v355
      %v567 = vmul.f32 %v358, %v358
      %v568 = vmul.f32 %v361, %v361
      %v569 = vmul.f32 %v364, %v364
      %v570 = vmul.f32 %v367, %v367
      %v571 = vmul.f32 %v370, %v370
      %v572 = vmul.f32 %v373, %v373
      %v573 = vmul.f32 %v376, %v376
      %v574 = vmul.f32 %v379, %v379
      %v575 = vmul.f32 %v382, %v382
      %v576 = vmul.f32 %v385, %v385
      %v577 = vmul.f32 %v388, %v388
      %v578 = vmul.f32 %v391, %v391
      %v579 = vadd.f32 %v551, %v552
      %v580 = vadd.f32 %v579, %v553
      %v581 = vadd.f32 %v580, %v554
      %v582 = vadd.f32 %v581, %v555
      %v583 = vadd.f32 %v582, %v556
      %v584 = vadd.f32 %v583, %v557
      %v585 = vadd.f32 %v584, %v558
      %v586 = vadd.f32 %v585, %v559
      %v587 = vadd.f32 %v586, %v560
      %v588 = vadd.f32 %v587, %v561
      %v589 = vadd.f32 %v588, %v562
      %v590 = vadd.f32 %v589, %v563
      %v591 = vadd.f32 %v590, %v564
      %v592 = vadd.f32 %v591, %v565
      %v593 = vadd.f32 %v592, %v566
      %v594 = vadd.f32 %v593, %v567
      %v595 = vadd.f32 %v594, %v568
      %v596 = vadd.f32 %v595, %v569
      %v597 = vadd.f32 %v596, %v570
      %v598 = vadd.f32 %v597, %v571
      %v599 = vadd.f32 %v598, %v572
      %v600 = vadd.f32 %v599, %v573
      %v601 = vadd.f32 %v600, %v574
      %v602 = vadd.f32 %v601, %v575
      %v603 = vadd.f32 %v602, %v576
      %v604 = vadd.f32 %v603, %v577
      %v605 = vadd.f32 %v604, %v578
      %v606 = vrot.slane %v605, 4
      %v607 = vadd.f32 %v605, %v606
      %v608 = vrot.slane %v607, 2
      %v609 = vadd.f32 %v607, %v608
      %v610 = vrot.slane %v609, 1
      %v611 = vadd.f32 %v609, %v610
      %vm612 = vcmask 1040384
      %v613 = vsel %vm612, %v550, %v611
      %614 = vmatpush.msra.mxu0 %v510
      %615 = vmatpush.msra.mxu0 %v509
      %616 = vmatpush.msra.mxu0 %v508
      %617 = vmatpush.msra.mxu0 %v507
      %618 = vmatpush.msra.mxu0 %v506
      %619 = vmatpush.msra.mxu0 %v505
      %620 = vmatpush.msra.mxu0 %v504
      %621 = vmatpush.msra.mxu0 %v503
      %622 = vmatpush.msra.mxu0 %v502
      %623 = vmatpush.msra.mxu0 %v501
      %624 = vmatpush.msra.mxu0 %v500
      %625 = vmatpush.msra.mxu0 %v499
      %626 = vmatpush.msra.mxu0 %v498
      %627 = vmatpush.msra.mxu0 %v497
      %628 = vmatpush.msra.mxu0 %v496
      %629 = vmatpush.msra.mxu0 %v495
      %630 = vmatmul.f32.gmra.mxu0 %v613
      %v631 = vpop.f32.mrf.mxu0
      %v632 = vadd.f32 0.0, %v631
      %633 = vdwg.mxu0
      %v634 = vmul.f32 %v632, 0.0025510204
      %v635 = vmul.f32 %v634, %v634
      %v637 = vrot.slane %v635, 7
      %v639 = vsub.f32 %v634, %v637
      %v640 = vmax.f32 %v639, 0.0
      %v641 = vadd.f32 %v640, 1e-05
      %v642 = vrsqrt.pop %v641
      %v643 = vmul.f32 %v642, %v641
      %v644 = vmul.f32 %v643, %v642
      %v645 = vmul.f32 0.5, %v644
      %v646 = vsub.f32 1.5, %v645
      %v647 = vmul.f32 %v642, %v646
      %vm648 = vweird.f32 %v641
      %vm649 = vweird.f32 %v642
      %vm650 = vmor %vm648, %vm649
      %v651 = vsel %vm650, %v642, %v647
      %v653 = vrot.slane %v517, 7
      %v655 = vmul.f32 %v651, %v653
      %v657 = vrot.slane %v655, 1
      %v659 = vmul.f32 %v634, %v657
      %v661 = vrot.slane %v659, 7
      %v663 = vsub.f32 %v517, %v661
      %v664 = vperm.slane %v655, 1
      %v665 = vmul.f32 %v310, %v664
      %v666 = vmul.f32 %v313, %v664
      %v667 = vmul.f32 %v316, %v664
      %v668 = vmul.f32 %v319, %v664
      %v669 = vmul.f32 %v322, %v664
      %v670 = vmul.f32 %v325, %v664
      %v671 = vmul.f32 %v328, %v664
      %v672 = vperm.slane %v663, 1
      %v673 = vadd.f32 %v665, %v672
      %v674 = vadd.f32 %v666, %v672
      %v675 = vadd.f32 %v667, %v672
      %v676 = vadd.f32 %v668, %v672
      %v677 = vadd.f32 %v669, %v672
      %v678 = vadd.f32 %v670, %v672
      %v679 = vadd.f32 %v671, %v672
      %v680 = vmax.f32 %v673, 0.0
      %v681 = vmax.f32 %v674, 0.0
      %v682 = vmax.f32 %v675, 0.0
      %v683 = vmax.f32 %v676, 0.0
      %v684 = vmax.f32 %v677, 0.0
      %v685 = vmax.f32 %v678, 0.0
      %v686 = vmax.f32 %v679, 0.0
      %v687 = vmin.f32 %v680, 1.0
      %v688 = vmin.f32 %v681, 1.0
      %v689 = vmin.f32 %v682, 1.0
      %v690 = vmin.f32 %v683, 1.0
      %v691 = vmin.f32 %v684, 1.0
      %v692 = vmin.f32 %v685, 1.0
      %v693 = vmin.f32 %v686, 1.0
      %v694 = vmul.f32 %v331, %v664
      %v695 = vmul.f32 %v334, %v664
      %v696 = vmul.f32 %v337, %v664
      %v697 = vmul.f32 %v340, %v664
      %v698 = vmul.f32 %v343, %v664
      %v699 = vmul.f32 %v346, %v664
      %v700 = vmul.f32 %v349, %v664
      %v701 = vadd.f32 %v694, %v672
      %v702 = vadd.f32 %v695, %v672
      %v703 = vadd.f32 %v696, %v672
      %v704 = vadd.f32 %v697, %v672
      %v705 = vadd.f32 %v698, %v672
      %v706 = vadd.f32 %v699, %v672
      %v707 = vadd.f32 %v700, %v672
      %v708 = vmax.f32 %v701, 0.0
      %v709 = vmax.f32 %v702, 0.0
      %v710 = vmax.f32 %v703, 0.0
      %v711 = vmax.f32 %v704, 0.0
      %v712 = vmax.f32 %v705, 0.0
      %v713 = vmax.f32 %v706, 0.0
      %v714 = vmax.f32 %v707, 0.0
      %v715 = vmin.f32 %v708, 1.0
      %v716 = vmin.f32 %v709, 1.0
      %v717 = vmin.f32 %v710, 1.0
      %v718 = vmin.f32 %v711, 1.0
      %v719 = vmin.f32 %v712, 1.0
      %v720 = vmin.f32 %v713, 1.0
      %v721 = vmin.f32 %v714, 1.0
      %v722 = vmax.f32 %v687, %v715
      %v723 = vmax.f32 %v688, %v716
      %v724 = vmax.f32 %v689, %v717
      %v725 = vmax.f32 %v690, %v718
      %v726 = vmax.f32 %v691, %v719
      %v727 = vmax.f32 %v692, %v720
      %v728 = vmax.f32 %v693, %v721
      %v729 = vmul.f32 %v352, %v664
      %v730 = vmul.f32 %v355, %v664
      %v731 = vmul.f32 %v358, %v664
      %v732 = vmul.f32 %v361, %v664
      %v733 = vmul.f32 %v364, %v664
      %v734 = vmul.f32 %v367, %v664
      %v735 = vmul.f32 %v370, %v664
      %v736 = vadd.f32 %v729, %v672
      %v737 = vadd.f32 %v730, %v672
      %v738 = vadd.f32 %v731, %v672
      %v739 = vadd.f32 %v732, %v672
      %v740 = vadd.f32 %v733, %v672
      %v741 = vadd.f32 %v734, %v672
      %v742 = vadd.f32 %v735, %v672
      %v743 = vmax.f32 %v736, 0.0
      %v744 = vmax.f32 %v737, 0.0
      %v745 = vmax.f32 %v738, 0.0
      %v746 = vmax.f32 %v739, 0.0
      %v747 = vmax.f32 %v740, 0.0
      %v748 = vmax.f32 %v741, 0.0
      %v749 = vmax.f32 %v742, 0.0
      %v750 = vmin.f32 %v743, 1.0
      %v751 = vmin.f32 %v744, 1.0
      %v752 = vmin.f32 %v745, 1.0
      %v753 = vmin.f32 %v746, 1.0
      %v754 = vmin.f32 %v747, 1.0
      %v755 = vmin.f32 %v748, 1.0
      %v756 = vmin.f32 %v749, 1.0
      %v757 = vmax.f32 %v722, %v750
      %v758 = vmax.f32 %v723, %v751
      %v759 = vmax.f32 %v724, %v752
      %v760 = vmax.f32 %v725, %v753
      %v761 = vmax.f32 %v726, %v754
      %v762 = vmax.f32 %v727, %v755
      %v763 = vmax.f32 %v728, %v756
      %v764 = vmul.f32 %v373, %v664
      %v765 = vmul.f32 %v376, %v664
      %v766 = vmul.f32 %v379, %v664
      %v767 = vmul.f32 %v382, %v664
      %v768 = vmul.f32 %v385, %v664
      %v769 = vmul.f32 %v388, %v664
      %v770 = vmul.f32 %v391, %v664
      %v771 = vadd.f32 %v764, %v672
      %v772 = vadd.f32 %v765, %v672
      %v773 = vadd.f32 %v766, %v672
      %v774 = vadd.f32 %v767, %v672
      %v775 = vadd.f32 %v768, %v672
      %v776 = vadd.f32 %v769, %v672
      %v777 = vadd.f32 %v770, %v672
      %v778 = vmax.f32 %v771, 0.0
      %v779 = vmax.f32 %v772, 0.0
      %v780 = vmax.f32 %v773, 0.0
      %v781 = vmax.f32 %v774, 0.0
      %v782 = vmax.f32 %v775, 0.0
      %v783 = vmax.f32 %v776, 0.0
      %v784 = vmax.f32 %v777, 0.0
      %v785 = vmin.f32 %v778, 1.0
      %v786 = vmin.f32 %v779, 1.0
      %v787 = vmin.f32 %v780, 1.0
      %v788 = vmin.f32 %v781, 1.0
      %v789 = vmin.f32 %v782, 1.0
      %v790 = vmin.f32 %v783, 1.0
      %v791 = vmin.f32 %v784, 1.0
      %v792 = vmax.f32 %v757, %v785
      %v793 = vmax.f32 %v758, %v786
      %v794 = vmax.f32 %v759, %v787
      %v795 = vmax.f32 %v760, %v788
      %v796 = vmax.f32 %v761, %v789
      %v797 = vmax.f32 %v762, %v790
      %v798 = vmax.f32 %v763, %v791
      %799 = vmatpush.xpose.msra.mxu0 0.0
      %800 = vmatpush.xpose.msra.mxu0 0.0
      %801 = vmatpush.xpose.msra.mxu0 0.0
      %802 = vmatpush.xpose.msra.mxu0 0.0
      %803 = vmatpush.xpose.msra.mxu0 0.0
      %804 = vmatpush.xpose.msra.mxu0 0.0
      %805 = vmatpush.xpose.msra.mxu0 0.0
      %806 = vmatpush.xpose.msra.mxu0 0.0
      %807 = vmatpush.xpose.msra.mxu0 0.0
      %808 = vmatpush.xpose.msra.mxu0 %v798
      %809 = vmatpush.xpose.msra.mxu0 %v797
      %810 = vmatpush.xpose.msra.mxu0 %v796
      %811 = vmatpush.xpose.msra.mxu0 %v795
      %812 = vmatpush.xpose.msra.mxu0 %v794
      %813 = vmatpush.xpose.msra.mxu0 %v793
      %814 = vmatpush.xpose.msra.mxu0 %v792
      %815 = vmatmul.f32.gmra.mxu0 %v515
      %v816 = vpop.f32.mrf.mxu0
      %v817 = vadd.f32 0.0, %v816
      %818 = vmatmul.f32.gmra.mxu0 %v516
      %v819 = vpop.f32.mrf.mxu0
      %v820 = vadd.f32 0.0, %v819
      %821 = vdwg.mxu0
      %vm822 = vcmask 457728
      %823 = vst.msk [vmem:[%s170] sm:$0xff] %vm822, %v817
      %824 = vst.msk [vmem:[%s170 + $0x8] sm:$0xff] %vm822, %v820
      %p825 = scmp.lt.s32.totalorder %s14, 1
      %s826 = scalar_select %p825, %s14, 1
      %s827 = smul.addr %s826, 2
      %s828 = smul.addr %s827, 8
      %s829 = scalar_lea.vmem %s3, %s828
      // Predicated region
      $region33: #{model_forward.1} parent=31 // pred_check
        %p830 = pneg %p100
      $region34: #{model_forward.1} parent=31 // pred_check_branch
        %832 = sbr.rel (%p830) target = $region36
      $region35: #{model_forward.1} parent=31 // pred_region
        _
      $region36: #{model_forward.1} parent=31 // pred_fallthru
        _
    $region32: #{model_forward.1} parent=5 // pred_fallthru
      _
    %p833 = scmp.le.s32.totalorder 2, %s9
    // Predicated region
    $region37: #{model_forward.1} parent=5 // pred_check
      %p834 = pneg %p833
    $region38: #{model_forward.1} parent=5 // pred_check_branch
      %836 = sbr.rel (%p834) target = $region40
    $region39: #{model_forward.1} parent=5 // pred_region
      %s837 = ssub.s32 %s9, 2
      // Predicated region
      $region41: #{model_forward.1} parent=39 // pred_check
        %p838 = pneg %p106
      $region42: #{model_forward.1} parent=39 // pred_check_branch
        %840 = sbr.rel (%p838) target = $region44
      $region43: #{model_forward.1} parent=39 // pred_region
        %p841 = scmp.lt.s32.totalorder %s15, 1
        %s842 = scalar_select %p841, %s15, 1
        %s843 = smul.addr %s842, 2
        %s844 = smul.addr %s843, 8
        %s845 = scalar_lea.vmem %s3, %s844
      $region44: #{model_forward.1} parent=39 // pred_fallthru
        _
    $region40: #{model_forward.1} parent=5 // pred_fallthru
      _
  $region6: #{model_forward.1} parent=0 // loop_footer
    %s13 = sadd.s32 1, %s9
  $region7: #{model_forward.1} parent=0 // loop_footer_branch
    %8 = sbr.rel target = $region3
  $region8: #{model_forward.1} parent=0 // loop_exit
    _

</llo_original>
